<compile_context>
chip_gen: v5e
topology: v5e:2x2
jax: 0.10.0
libtpu: 0.0.40
codegen_flags: <defaults>
</compile_context>

<pallas_src>
import math

import jax
import jax.numpy as jnp
import numpy as np
from jax.experimental import pallas as pl
from jax.experimental.pallas import tpu as pltpu

LEAKY_RATE = 0.1


def _conv1d_k1_kernel(x_ref, w_ref, b_ref, o_ref):
    # x_ref: (Bb, C_in, tn)   w_ref: (C_out, C_in)   b_ref: (C_out, 1)
    # o_ref: (Bb, C_out, tn)  -- N on the lane axis -> lane-dense unmasked vst.
    w = w_ref[...]
    bvec = b_ref[...].astype(jnp.float32)            # lane-broadcast bias
    for b in range(x_ref.shape[0]):                   # Bb <= 8, static unroll
        acc = jnp.dot(w, x_ref[b], preferred_element_type=jnp.float32)
        acc = acc + bvec
        out = jnp.where(acc > 0, acc, jnp.float32(LEAKY_RATE) * acc)  # LeakyReLU(0.1)
        o_ref[b] = out.astype(o_ref.dtype)


def _vmem_budgets():
    """Returns (double-buffered per-step tile budget, scoped vmem limit) bytes."""
    try:
        kind = jax.devices()[0].device_kind.lower()
    except Exception:
        kind = ""
    if ("v5" in kind) or ("v6" in kind):
        # 128 MiB physical VMEM: fewer, larger grid steps.
        return 24 * 1024 * 1024, 64 * 1024 * 1024
    # v7x (64 MiB physical, 32 MiB scoped default) or unknown: conservative.
    return 12 * 1024 * 1024, 32 * 1024 * 1024


def _pick_n_tile(N, per_lane_tile_bytes, budget_bytes):
    """Largest lane tile (multiple of 128) whose double-buffered footprint fits
    the budget and whose tail-padding waste stays small (<~12.5% of N)."""
    tn = 128
    for cand in (256, 512, 1024, 2048, 4096, 8192, 16384, 32768):
        if cand * per_lane_tile_bytes > budget_bytes:
            break
        padded = -(-N // cand) * cand
        if padded - N <= max(N // 8, 127):
            tn = cand
    return tn


def conv1d_forward(x, weight, bias, compute_dtype=None, out_dtype=None):
    """Conv1d(k=1, s=1, p=0, bias=True, bn=False) + LeakyReLU(0.1), NCW layout.

    Args:
      x:      (B, C_in, N)   -- PyTorch NCW layout
      weight: (C_out, C_in)  -- squeezed PyTorch conv weight (C_out, C_in, 1)
      bias:   (C_out,)
      compute_dtype: optional (e.g. jnp.bfloat16) to halve x/weight HBM read
        bytes; accumulation / bias / activation stay f32.
      out_dtype: optional output dtype (e.g. jnp.bfloat16) to halve the
        dominant output-write HBM stream.  Defaults to x's dtype.
    Returns:
      (B, C_out, N) in out_dtype.
    """
    B, C_in, N = x.shape
    C_out = weight.shape[0]
    if out_dtype is None:
        out_dtype = x.dtype

    if compute_dtype is not None:
        x = x.astype(compute_dtype)
        weight = weight.astype(compute_dtype)

    w2 = weight                   # (C_out, C_in) -- already MXU-friendly
    b2 = bias.reshape(C_out, 1)   # sublane vector; broadcast over lanes in-kernel

    in_item = jnp.dtype(x.dtype).itemsize
    out_item = jnp.dtype(out_dtype).itemsize

    # Fold the whole batch into the block when it's small (fewer grid steps).
    block_b = B if B <= 8 else 1
    # Double-buffered x tile + out tile, per lane element.
    per_lane_tile_bytes = 2 * block_b * (C_in * in_item + C_out * out_item)
    budget, vmem_limit = _vmem_budgets()
    tn = _pick_n_tile(N, per_lane_tile_bytes, budget)

    num_n = -(-N // tn)
    n_padded = num_n * tn
    if n_padded != N:
        # Host-side zero-pad N up to a tile multiple (keeps pipelining, avoids
        # the old single-full-N-block fallback that could OOM v7x VMEM).
        x = jnp.pad(x, ((0, 0), (0, 0), (0, n_padded - N)))

    # High-trip-count N-tile axis leads so megacore splits it on v7x.
    grid = (num_n, B // block_b)

    cost = pl.CostEstimate(
        flops=2 * B * N * C_in * C_out,
        transcendentals=0,
        bytes_accessed=(B * C_in * n_padded * in_item
                        + w2.size * jnp.dtype(w2.dtype).itemsize
                        + bias.size * jnp.dtype(bias.dtype).itemsize
                        + B * C_out * n_padded * out_item),
    )

    out = pl.pallas_call(
        _conv1d_k1_kernel,
        out_shape=jax.ShapeDtypeStruct((B, C_out, n_padded), out_dtype),
        grid=grid,
        in_specs=[
            # x tile: (block_b, C_in, tn) -- N on the lane axis, auto-pipelined.
            pl.BlockSpec((block_b, C_in, tn), lambda j, b: (b, 0, j)),
            # weight / bias: constant index_map -> stay resident in VMEM.
            pl.BlockSpec((C_out, C_in), lambda j, b: (0, 0)),
            pl.BlockSpec((C_out, 1), lambda j, b: (0, 0)),
        ],
        # lane-dense output block (tn on the lane axis) -> unmasked stores.
        out_specs=pl.BlockSpec((block_b, C_out, tn), lambda j, b: (b, 0, j)),
        compiler_params=pltpu.CompilerParams(
            dimension_semantics=("parallel", "parallel"),
            vmem_limit_bytes=vmem_limit,
        ),
        cost_estimate=cost,
    )(x, w2, b2)

    if n_padded != N:
        out = out[:, :, :N]
    return out


def init_params(key, in_channels, out_channels):
    """Deterministic init matching nn.Conv1d defaults (kaiming uniform / fan_in)."""
    k_w, k_b = jax.random.split(key)
    fan_in = in_channels * 1  # kernel_size = 1
    bound_w = math.sqrt(1.0 / fan_in) * math.sqrt(3.0)  # kaiming_uniform(a=sqrt(5))
    weight = jax.random.uniform(
        k_w, (out_channels, in_channels), jnp.float32, -bound_w, bound_w
    )
    bound_b = 1.0 / math.sqrt(fan_in)
    bias = jax.random.uniform(k_b, (out_channels,), jnp.float32, -bound_b, bound_b)
    return weight, bias


def _reference(x, weight, bias):
    ref = jnp.einsum("oc,bcn->bon", weight, x) + bias[None, :, None]
    return jnp.where(ref > 0, ref, LEAKY_RATE * ref)


if __name__ == "__main__":
    key = jax.random.PRNGKey(0)
    k_x, k_x2, k_p = jax.random.split(key, 3)

    B, C_in, C_out = 2, 4, 32
    weight, bias = init_params(k_p, C_in, C_out)

    # Case 1: tiny ragged N (exercises host-side padding to a 128 multiple).
    N1 = 16
    x1 = jax.random.normal(k_x, (B, C_in, N1), dtype=jnp.float32)
    out1 = jax.block_until_ready(conv1d_forward(x1, weight, bias))
    np.testing.assert_allclose(
        np.asarray(out1), np.asarray(_reference(x1, weight, bias)),
        rtol=1e-5, atol=1e-5)
    assert out1.shape == (B, C_out, N1)

    # Case 2: lane-dense N (tiled grid path, no padding).
    N2 = 256
    x2 = jax.random.normal(k_x2, (B, C_in, N2), dtype=jnp.float32)
    out2 = jax.block_until_ready(conv1d_forward(x2, weight, bias))
    np.testing.assert_allclose(
        np.asarray(out2), np.asarray(_reference(x2, weight, bias)),
        rtol=1e-5, atol=1e-5)
    assert out2.shape == (B, C_out, N2)

    # Case 3: bf16 output stream (halves the dominant HBM write traffic).
    out3 = jax.block_until_ready(
        conv1d_forward(x2, weight, bias, out_dtype=jnp.bfloat16))
    np.testing.assert_allclose(
        np.asarray(out3, dtype=np.float32),
        np.asarray(_reference(x2, weight, bias)),
        rtol=1e-2, atol=1e-2)
    assert out3.dtype == jnp.bfloat16 and out3.shape == (B, C_out, N2)

    print("KERNEL_OK")
</pallas_src>

<mosaic_0001>
module attributes {stable_mosaic.version = 11 : i64} {
  func.func @_conv1d_k1_kernel(%arg0: i32, %arg1: i32, %arg2: memref<2x4x128xf32, #tpu.memory_space<vmem>>, %arg3: memref<32x4xf32, #tpu.memory_space<vmem>>, %arg4: memref<32x1xf32, #tpu.memory_space<vmem>>, %arg5: memref<2x32x128xf32, #tpu.memory_space<vmem>>) attributes {dimension_semantics = [#tpu.dimension_semantics<parallel>, #tpu.dimension_semantics<parallel>], iteration_bounds = array<i64: 1, 1>, scalar_prefetch = 0 : i64, scratch_operands = 0 : i64, tpu.core_type = #tpu.core_type<tc>, window_params = [{transform_indices = @transform_0, window_bounds = array<i64: 2, 4, 128>}, {pipeline_mode = #tpu.pipeline_mode<synchronous>, transform_indices = @transform_1, window_bounds = array<i64: 32, 4>}, {pipeline_mode = #tpu.pipeline_mode<synchronous>, transform_indices = @transform_2, window_bounds = array<i64: 32, 1>}, {transform_indices = @transform_3, window_bounds = array<i64: 2, 32, 128>}]} {
    %c0 = arith.constant 0 : index
    %c0_0 = arith.constant 0 : index
    %0 = vector.load %arg3[%c0, %c0_0] : memref<32x4xf32, #tpu.memory_space<vmem>>, vector<32x4xf32>
    %c0_1 = arith.constant 0 : index
    %c0_2 = arith.constant 0 : index
    %1 = vector.load %arg4[%c0_1, %c0_2] : memref<32x1xf32, #tpu.memory_space<vmem>>, vector<32x1xf32>
    %c0_3 = arith.constant 0 : index
    %c0_4 = arith.constant 0 : index
    %c0_5 = arith.constant 0 : index
    %2 = vector.load %arg2[%c0_3, %c0_4, %c0_5] : memref<2x4x128xf32, #tpu.memory_space<vmem>>, vector<1x4x128xf32>
    %3 = vector.shape_cast %2 : vector<1x4x128xf32> to vector<4x128xf32>
    %cst = arith.constant dense<0.000000e+00> : vector<32x128xf32>
    %4 = tpu.matmul %0, %3, %cst {dimension_numbers = #tpu.dot_dimension_numbers<[1], [0], [0], [1], [0, 0, 1, 1], [], []>} : vector<32x4xf32>, vector<4x128xf32>, vector<32x128xf32> -> vector<32x128xf32>
    %5 = vector.broadcast %1 : vector<32x1xf32> to vector<32x128xf32>
    %6 = arith.addf %4, %5 : vector<32x128xf32>
    %cst_6 = arith.constant 0.000000e+00 : f32
    %7 = vector.broadcast %cst_6 : f32 to vector<32x128xf32>
    %8 = arith.cmpf ogt, %6, %7 : vector<32x128xf32>
    %cst_7 = arith.constant 1.000000e-01 : f32
    %9 = vector.broadcast %cst_7 : f32 to vector<32x128xf32>
    %10 = arith.mulf %9, %6 : vector<32x128xf32>
    %11 = arith.select %8, %6, %10 : vector<32x128xi1>, vector<32x128xf32>
    %c0_8 = arith.constant 0 : index
    %c0_9 = arith.constant 0 : index
    %c0_10 = arith.constant 0 : index
    %12 = vector.load %arg5[%c0_8, %c0_9, %c0_10] : memref<2x32x128xf32, #tpu.memory_space<vmem>>, vector<1x32x128xf32>
    %13 = vector.shape_cast %12 : vector<1x32x128xf32> to vector<32x128xf32>
    %14 = vector.shape_cast %11 : vector<32x128xf32> to vector<1x32x128xf32>
    tpu.vector_store %arg5[%c0_8, %c0_9, %c0_10], %14 {strides = array<i32>} : memref<2x32x128xf32, #tpu.memory_space<vmem>>, vector<1x32x128xf32>,
    %c1 = arith.constant 1 : index
    %c0_11 = arith.constant 0 : index
    %c0_12 = arith.constant 0 : index
    %15 = vector.load %arg2[%c1, %c0_11, %c0_12] : memref<2x4x128xf32, #tpu.memory_space<vmem>>, vector<1x4x128xf32>
    %16 = vector.shape_cast %15 : vector<1x4x128xf32> to vector<4x128xf32>
    %cst_13 = arith.constant dense<0.000000e+00> : vector<32x128xf32>
    %17 = tpu.matmul %0, %16, %cst_13 {dimension_numbers = #tpu.dot_dimension_numbers<[1], [0], [0], [1], [0, 0, 1, 1], [], []>} : vector<32x4xf32>, vector<4x128xf32>, vector<32x128xf32> -> vector<32x128xf32>
    %18 = vector.broadcast %1 : vector<32x1xf32> to vector<32x128xf32>
    %19 = arith.addf %17, %18 : vector<32x128xf32>
    %cst_14 = arith.constant 0.000000e+00 : f32
    %20 = vector.broadcast %cst_14 : f32 to vector<32x128xf32>
    %21 = arith.cmpf ogt, %19, %20 : vector<32x128xf32>
    %cst_15 = arith.constant 1.000000e-01 : f32
    %22 = vector.broadcast %cst_15 : f32 to vector<32x128xf32>
    %23 = arith.mulf %22, %19 : vector<32x128xf32>
    %24 = arith.select %21, %19, %23 : vector<32x128xi1>, vector<32x128xf32>
    %c1_16 = arith.constant 1 : index
    %c0_17 = arith.constant 0 : index
    %c0_18 = arith.constant 0 : index
    %25 = vector.load %arg5[%c1_16, %c0_17, %c0_18] : memref<2x32x128xf32, #tpu.memory_space<vmem>>, vector<1x32x128xf32>
    %26 = vector.shape_cast %25 : vector<1x32x128xf32> to vector<32x128xf32>
    %27 = vector.shape_cast %24 : vector<32x128xf32> to vector<1x32x128xf32>
    tpu.vector_store %arg5[%c1_16, %c0_17, %c0_18], %27 {strides = array<i32>} : memref<2x32x128xf32, #tpu.memory_space<vmem>>, vector<1x32x128xf32>,
    return
  }
  func.func @transform_0(%arg0: i32, %arg1: i32) -> (i32, i32, i32) {
    %c0_i32 = arith.constant 0 : i32
    %c0_i32_0 = arith.constant 0 : i32
    return %arg1, %c0_i32, %arg0 : i32, i32, i32
  }
  func.func @transform_1(%arg0: i32, %arg1: i32) -> (i32, i32) {
    %c0_i32 = arith.constant 0 : i32
    %c0_i32_0 = arith.constant 0 : i32
    %c0_i32_1 = arith.constant 0 : i32
    return %c0_i32, %c0_i32_0 : i32, i32
  }
  func.func @transform_2(%arg0: i32, %arg1: i32) -> (i32, i32) {
    %c0_i32 = arith.constant 0 : i32
    %c0_i32_0 = arith.constant 0 : i32
    %c0_i32_1 = arith.constant 0 : i32
    return %c0_i32, %c0_i32_0 : i32, i32
  }
  func.func @transform_3(%arg0: i32, %arg1: i32) -> (i32, i32, i32) {
    %c0_i32 = arith.constant 0 : i32
    %c0_i32_0 = arith.constant 0 : i32
    return %arg1, %c0_i32, %arg0 : i32, i32, i32
  }
}

</mosaic_0001>

<llo_original>
// kernel: tpu_custom_call.1
$region0: #{tpu_custom_call.1}
  #allocation0 [shape = 'u32[]', space=smem, size = 0x4, offset = 0x4, fixed_abs, tag = 'smem constant byte address 0x4 - core index']
  #allocation1 [shape = 'u32[72,128]{1,0:T(1,128)}', space=vmem, size = 0x9000, scoped, tag = 'internal scratch']
  %s0 = inlined_call_operand.vmem [shape: f32[2,4,128], index: 0, kind: input, shape index: {}]
  %s1 = inlined_call_operand.vmem [shape: f32[32,4], index: 1, kind: input, shape index: {}]
  %s2 = inlined_call_operand.vmem [shape: f32[32,1], index: 2, kind: input, shape index: {}]
  %s3 = inlined_call_operand.hbm [shape: f32[2,32,128], index: 3, kind: output, shape index: {}]
  %s4 = sld [smem:[#allocation0]]
  $region22: #{tpu_custom_call.1} parent=0
    _
  %s6 = ssub.s32 1, %s4
  %s7 = scalar_select 0, %s6, %s4
  $region1: #{tpu_custom_call.1} parent=0
    #allocation2 [shape = 'u8[32768]{0}', space=vmem, size = 0x8000, scoped, tag = 'output window, operand 0, single buffered']
    #allocation3 [shape = 's32[1]{0}', space=sflag, size = 0x4, scoped, tag = 'scoped memory for tpu_custom_call.1']
    %8 = vsyncpa [#allocation3], 0
    // Predicated region
    $region2: #{tpu_custom_call.1} parent=1 // pred_check
      _
    $region3: #{tpu_custom_call.1} parent=1 // pred_check_branch
      %10 = sbr.rel (0) target = $region5
    $region4: #{tpu_custom_call.1} parent=1 // pred_region
      _
    $region5: #{tpu_custom_call.1} parent=1 // pred_fallthru
      _
    // Predicated region
    $region6: #{tpu_custom_call.1} parent=1 // pred_check
      _
    $region7: #{tpu_custom_call.1} parent=1 // pred_check_branch
      %12 = sbr.rel (0) target = $region9
    $region8: #{tpu_custom_call.1} parent=1 // pred_region
      _
    $region9: #{tpu_custom_call.1} parent=1 // pred_fallthru
      _
    // Predicated region
    $region10: #{tpu_custom_call.1} parent=1 // pred_check
      _
    $region11: #{tpu_custom_call.1} parent=1 // pred_check_branch
      %14 = sbr.rel (0) target = $region13
    $region12: #{tpu_custom_call.1} parent=1 // pred_region
      _
    $region13: #{tpu_custom_call.1} parent=1 // pred_fallthru
      _
    %v15 = vld [vmem:[%s1] sm:$0xff]
    %v16 = vld [vmem:[%s1 + $0x8] sm:$0xff]
    %v17 = vld [vmem:[%s1 + $0x10] sm:$0xff]
    %v18 = vld [vmem:[%s1 + $0x18] sm:$0xff]
    %v19 = vld [vmem:[%s2] sm:$0xff]
    %v20 = vld [vmem:[%s2 + $0x8] sm:$0xff]
    %v21 = vld [vmem:[%s2 + $0x10] sm:$0xff]
    %v22 = vld [vmem:[%s2 + $0x18] sm:$0xff]
    %v23 = vld [vmem:[%s0] sm:$0xf]
    %25 = vset.pattern.permute.xlu0 0
    %26 = vperm.xlu0 %25, %v19
    %v27 = vpop.permute.xlu0 %26
    %30 = vset.pattern.permute.xlu0 0
    %31 = vperm.xlu0 %30, %v20
    %v32 = vpop.permute.xlu0 %31
    %35 = vset.pattern.permute.xlu0 0
    %36 = vperm.xlu0 %35, %v21
    %v37 = vpop.permute.xlu0 %36
    %40 = vset.pattern.permute.xlu0 0
    %41 = vperm.xlu0 %40, %v22
    %v42 = vpop.permute.xlu0 %41
    %vm44 = vcmask 31744
    %v46 = vsel %vm44, %v15, 0
    %v49 = vsel %vm44, %v16, 0
    %v52 = vsel %vm44, %v17, 0
    %v55 = vsel %vm44, %v18, 0
    %vm57 = vcmask 1043456
    %v59 = vsel %vm57, %v23, 0
    %61 = vmatpush.msra.mxu0 0.0
    %62 = vmatpush.msra.mxu0 0.0
    %63 = vmatpush.msra.mxu0 0.0
    %64 = vmatpush.msra.mxu0 0.0
    %65 = vmatpush.msra.mxu0 0.0
    %66 = vmatpush.msra.mxu0 0.0
    %67 = vmatpush.msra.mxu0 0.0
    %68 = vmatpush.msra.mxu0 0.0
    %69 = vmatpush.msra.mxu0 0.0
    %70 = vmatpush.msra.mxu0 0.0
    %71 = vmatpush.msra.mxu0 0.0
    %72 = vmatpush.msra.mxu0 0.0
    %73 = vmatpush.msra.mxu0 0.0
    %74 = vmatpush.msra.mxu0 0.0
    %75 = vmatpush.msra.mxu0 0.0
    %76 = vmatpush.msra.mxu0 %v59
    %77 = vmatmul.f32.gmra.mxu0 %v46
    %v78 = vpop.f32.mrf.mxu0
    %v79 = vadd.f32 %v27, %v78
    %80 = vmatmul.f32.gmra.mxu0 %v49
    %v81 = vpop.f32.mrf.mxu0
    %v82 = vadd.f32 %v32, %v81
    %83 = vmatmul.f32.gmra.mxu0 %v52
    %v84 = vpop.f32.mrf.mxu0
    %v85 = vadd.f32 %v37, %v84
    %86 = vmatmul.f32.gmra.mxu0 %v55
    %v87 = vpop.f32.mrf.mxu0
    %v88 = vadd.f32 %v42, %v87
    %89 = vdwg.mxu0
    %vm90 = vcmp.gt.f32.partialorder %v79, 0.0
    %vm91 = vcmp.gt.f32.partialorder %v82, 0.0
    %vm92 = vcmp.gt.f32.partialorder %v85, 0.0
    %vm93 = vcmp.gt.f32.partialorder %v88, 0.0
    %v94 = vmul.f32 %v79, 0.1
    %v95 = vmul.f32 %v82, 0.1
    %v96 = vmul.f32 %v85, 0.1
    %v97 = vmul.f32 %v88, 0.1
    %v98 = vsel %vm90, %v79, %v94
    %v99 = vsel %vm91, %v82, %v95
    %v100 = vsel %vm92, %v85, %v96
    %v101 = vsel %vm93, %v88, %v97
    %102 = vst [vmem:[#allocation2] sm:$0xff] %v98
    %103 = vst [vmem:[#allocation2 + $0x8] sm:$0xff] %v99
    %104 = vst [vmem:[#allocation2 + $0x10] sm:$0xff] %v100
    %105 = vst [vmem:[#allocation2 + $0x18] sm:$0xff] %v101
    %s106 = scalar_lea.vmem %s0, 4
    %v107 = vld [vmem:[%s106] sm:$0xf]
    %v109 = vsel %vm57, %v107, 0
    %111 = vmatpush.msra.mxu0 0.0
    %112 = vmatpush.msra.mxu0 0.0
    %113 = vmatpush.msra.mxu0 0.0
    %114 = vmatpush.msra.mxu0 0.0
    %115 = vmatpush.msra.mxu0 0.0
    %116 = vmatpush.msra.mxu0 0.0
    %117 = vmatpush.msra.mxu0 0.0
    %118 = vmatpush.msra.mxu0 0.0
    %119 = vmatpush.msra.mxu0 0.0
    %120 = vmatpush.msra.mxu0 0.0
    %121 = vmatpush.msra.mxu0 0.0
    %122 = vmatpush.msra.mxu0 0.0
    %123 = vmatpush.msra.mxu0 0.0
    %124 = vmatpush.msra.mxu0 0.0
    %125 = vmatpush.msra.mxu0 0.0
    %126 = vmatpush.msra.mxu0 %v109
    %127 = vmatmul.f32.gmra.mxu0 %v46
    %v128 = vpop.f32.mrf.mxu0
    %v129 = vadd.f32 %v27, %v128
    %130 = vmatmul.f32.gmra.mxu0 %v49
    %v131 = vpop.f32.mrf.mxu0
    %v132 = vadd.f32 %v32, %v131
    %133 = vmatmul.f32.gmra.mxu0 %v52
    %v134 = vpop.f32.mrf.mxu0
    %v135 = vadd.f32 %v37, %v134
    %136 = vmatmul.f32.gmra.mxu0 %v55
    %v137 = vpop.f32.mrf.mxu0
    %v138 = vadd.f32 %v42, %v137
    %139 = vdwg.mxu0
    %vm140 = vcmp.gt.f32.partialorder %v129, 0.0
    %vm141 = vcmp.gt.f32.partialorder %v132, 0.0
    %vm142 = vcmp.gt.f32.partialorder %v135, 0.0
    %vm143 = vcmp.gt.f32.partialorder %v138, 0.0
    %v144 = vmul.f32 %v129, 0.1
    %v145 = vmul.f32 %v132, 0.1
    %v146 = vmul.f32 %v135, 0.1
    %v147 = vmul.f32 %v138, 0.1
    %v148 = vsel %vm140, %v129, %v144
    %v149 = vsel %vm141, %v132, %v145
    %v150 = vsel %vm142, %v135, %v146
    %v151 = vsel %vm143, %v138, %v147
    %s152 = scalar_lea.vmem [#allocation2], 32
    %153 = vst [vmem:[%s152] sm:$0xff] %v148
    %154 = vst [vmem:[%s152 + $0x8] sm:$0xff] %v149
    %155 = vst [vmem:[%s152 + $0x10] sm:$0xff] %v150
    %156 = vst [vmem:[%s152 + $0x18] sm:$0xff] %v151
    // Predicated region
    $region14: #{tpu_custom_call.1} parent=1 // pred_check
      _
    $region15: #{tpu_custom_call.1} parent=1 // pred_check_branch
      %158 = sbr.rel (0) target = $region17
    $region16: #{tpu_custom_call.1} parent=1 // pred_region
      %160 = vsyncadd [#allocation3], 0
      %s161 = sshll.u32 [#allocation2], 4
      %s162 = int_to_ptr.vmem [resolvable:$true] %s161
      %s163 = sshll.u32 %s3, 4
      %s164 = int_to_ptr.hbm [resolvable:$true] %s163
      %169 = dma.vmem_to_hbm [thread:$0]  %s162, 1024, %s164, [#allocation3], 128, 128, 8
    $region17: #{tpu_custom_call.1} parent=1 // pred_fallthru
      _
    // Predicated region
    $region18: #{tpu_custom_call.1} parent=1 // pred_check
      _
    $region19: #{tpu_custom_call.1} parent=1 // pred_check_branch
      %171 = sbr.rel (0) target = $region21
    $region20: #{tpu_custom_call.1} parent=1 // pred_region
      %173 = dma.done [#allocation3], 1024
    $region21: #{tpu_custom_call.1} parent=1 // pred_fallthru
      _
    %174 = vsyncpa [#allocation3], 1

</llo_original>
